<compile_context>
chip_gen: v7x
topology: tpu7x:2x2x1
jax: 0.10.0
libtpu: 0.0.40
codegen_flags: <defaults>
</compile_context>

<pallas_src>
import jax
import jax.numpy as jnp
from jax.experimental import pallas as pl
from jax.experimental.pallas import tpu as pltpu


def _softplus_kernel(sig_ref, out_ref):
    """sigma = softplus(sigma_raw) with PyTorch F.softplus(threshold=20) semantics."""
    x = sig_ref[...].astype(jnp.float32)  # compute in f32 (v5e has no bf16 VPU/EUP)
    #   x                 if x > 20
    #   log1p(exp(x))     otherwise   (overflow-safe via min before exp)
    y = jnp.where(x > 20.0, x, jnp.log1p(jnp.exp(jnp.minimum(x, 20.0))))
    out_ref[...] = y.astype(out_ref.dtype)


def infer_latent(logits, *, batch_tile=None, vmem_budget_bytes=16 << 20):
    """Pallas equivalent of BaseVAE._infer_latent / generate_gaussian.

    Args:
      logits: (B, 2*latent_dim) array; first half of the channel axis is mu,
        second half is the (pre-softplus) sigma logits.
    Returns:
      (mu, sigma): parameters of the Normal distribution, each (B, latent_dim).
    """
    B, two_d = logits.shape
    assert two_d % 2 == 0, "channel dim must be 2*latent_dim"
    d = two_d // 2
    dtype = logits.dtype
    itemsize = jnp.dtype(dtype).itemsize

    # mu is a pure copy -> keep it out of the kernel entirely (DMA-only slice).
    mu = logits[:, :d]

    # ---- batch tile selection -------------------------------------------------
    sublane = 8 if itemsize >= 4 else 16
    if batch_tile is None:
        # Double-buffered VMEM footprint per step ~ 2*(in + out) = 4*bt*d*itemsize.
        cap_vmem = max(sublane, vmem_budget_bytes // max(1, 4 * d * itemsize))
        # Give the grid >= 2 steps so the parallel batch axis can shard across
        # v7x's two TensorCores (harmless on v5e/v6e).
        cap_parallel = max(sublane, pl.cdiv(B, 2)) if B >= 2 * sublane else B
        batch_tile = min(B, 1024, cap_vmem, cap_parallel)
    if batch_tile < B:
        batch_tile = max(sublane, (batch_tile // sublane) * sublane)
    batch_tile = min(batch_tile, B)

    grid = (pl.cdiv(B, batch_tile),)
    cost = pl.CostEstimate(
        flops=4 * B * d,
        transcendentals=2 * B * d,
        bytes_accessed=2 * B * d * itemsize,  # kernel reads + writes only the sigma half
    )
    compiler_params = pltpu.CompilerParams(
        dimension_semantics=("parallel",),
    )
    out_shape = jax.ShapeDtypeStruct((B, d), dtype)
    out_spec = pl.BlockSpec((batch_tile, d), lambda i: (i, 0))

    lane_aligned = (d % 128 == 0) and (batch_tile == B or batch_tile % sublane == 0)
    if lane_aligned:
        # Fast path: the DMA/BlockSpec does the channel split.  Column block
        # index 1 of logits == the sigma half; kernel never sees mu.
        sigma = pl.pallas_call(
            _softplus_kernel,
            out_shape=out_shape,
            grid_spec=pltpu.PrefetchScalarGridSpec(
                num_scalar_prefetch=0,
                grid=grid,
                in_specs=[pl.BlockSpec((batch_tile, d), lambda i: (i, 1))],
                out_specs=out_spec,
            ),
            compiler_params=compiler_params,
            cost_estimate=cost,
        )(logits)
    else:
        # Fallback (latent_dim not a multiple of 128): slice the sigma half in
        # the wrapper so the kernel sees a lane-contiguous (B, d) slab and the
        # block's last dim equals the full array dim (no (8,128) violation,
        # no in-kernel cross-lane relayout).
        sig_raw = logits[:, d:]
        sigma = pl.pallas_call(
            _softplus_kernel,
            out_shape=out_shape,
            grid_spec=pltpu.PrefetchScalarGridSpec(
                num_scalar_prefetch=0,
                grid=grid,
                in_specs=[pl.BlockSpec((batch_tile, d), lambda i: (i, 0))],
                out_specs=out_spec,
            ),
            compiler_params=compiler_params,
            cost_estimate=cost,
        )(sig_raw)

    return mu, sigma


class BaseVAEPallas:
    """JAX/Pallas mirror of BaseVAE (encode/decode/forward stay abstract)."""

    def __init__(self, input_size, latent_dim):
        self.input_size = input_size
        self.latent_dim = latent_dim

    def _infer_latent(self, logits):
        # Returns Normal parameters (loc, scale) instead of a torch Distribution.
        return infer_latent(logits)

    # TODO(synk): encode / decode / forward / infer_flat_size are abstract in
    # BaseVAE (raise NotImplementedError) — nothing to lower to Pallas here.
    def forward(self, x):
        raise NotImplementedError


def _reference(logits):
    d = logits.shape[1] // 2
    mu = logits[:, :d]
    s = logits[:, d:].astype(jnp.float32)
    sigma = jnp.where(s > 20.0, s, jnp.log1p(jnp.exp(jnp.minimum(s, 20.0))))
    return mu, sigma.astype(logits.dtype)


if __name__ == "__main__":
    key = jax.random.PRNGKey(0)

    # ---- lane-dense fast path: latent_dim % 128 == 0 --------------------------
    batch, latent_dim = 16, 128
    model = BaseVAEPallas(input_size=latent_dim, latent_dim=latent_dim)
    k0, k1 = jax.random.split(key)
    logits = jax.random.normal(k0, (batch, 2 * latent_dim), dtype=jnp.float32) * 3.0

    mu, sigma = model._infer_latent(logits)
    jax.block_until_ready((mu, sigma))

    mu_ref, sigma_ref = _reference(logits)
    assert mu.shape == (batch, latent_dim) and sigma.shape == (batch, latent_dim)
    assert jnp.allclose(mu, mu_ref, atol=1e-6, rtol=1e-6)
    assert jnp.allclose(sigma, sigma_ref, atol=1e-5, rtol=1e-5)
    assert bool(jnp.all(sigma >= 0.0))

    # ---- fallback path: latent_dim not a multiple of 128 -----------------------
    batch2, latent_dim2 = 16, 64
    logits2 = jax.random.normal(k1, (batch2, 2 * latent_dim2), dtype=jnp.float32) * 3.0
    mu2, sigma2 = infer_latent(logits2)
    jax.block_until_ready((mu2, sigma2))
    mu2_ref, sigma2_ref = _reference(logits2)
    assert jnp.allclose(mu2, mu2_ref, atol=1e-6, rtol=1e-6)
    assert jnp.allclose(sigma2, sigma2_ref, atol=1e-5, rtol=1e-5)

    print("KERNEL_OK")
</pallas_src>

<mosaic_0001>
module attributes {stable_mosaic.version = 11 : i64} {
  func.func @_softplus_kernel(%arg0: i32, %arg1: memref<8x128xf32, #tpu.memory_space<vmem>>, %arg2: memref<8x128xf32, #tpu.memory_space<vmem>>) attributes {dimension_semantics = [#tpu.dimension_semantics<parallel>], iteration_bounds = array<i64: 2>, scalar_prefetch = 0 : i64, scratch_operands = 0 : i64, tpu.core_type = #tpu.core_type<tc>, window_params = [{transform_indices = @transform_0, window_bounds = array<i64: 8, 128>}, {transform_indices = @transform_1, window_bounds = array<i64: 8, 128>}]} {
    %c0 = arith.constant 0 : index
    %c0_0 = arith.constant 0 : index
    %0 = vector.load %arg1[%c0, %c0_0] : memref<8x128xf32, #tpu.memory_space<vmem>>, vector<8x128xf32>
    %cst = arith.constant 2.000000e+01 : f32
    %1 = vector.broadcast %cst : f32 to vector<8x128xf32>
    %2 = arith.cmpf ogt, %0, %1 : vector<8x128xf32>
    %cst_1 = arith.constant 2.000000e+01 : f32
    %3 = vector.broadcast %cst_1 : f32 to vector<8x128xf32>
    %4 = arith.minimumf %0, %3 : vector<8x128xf32>
    %5 = math.exp %4 : vector<8x128xf32>
    %6 = math.log1p %5 : vector<8x128xf32>
    %7 = arith.select %2, %0, %6 : vector<8x128xi1>, vector<8x128xf32>
    %c0_2 = arith.constant 0 : index
    %c0_3 = arith.constant 0 : index
    %8 = vector.load %arg2[%c0_2, %c0_3] : memref<8x128xf32, #tpu.memory_space<vmem>>, vector<8x128xf32>
    tpu.vector_store %arg2[%c0_2, %c0_3], %7 {strides = array<i32>} : memref<8x128xf32, #tpu.memory_space<vmem>>, vector<8x128xf32>,
    return
  }
  func.func @transform_0(%arg0: i32) -> (i32, i32) {
    %c1_i32 = arith.constant 1 : i32
    %c0_i32 = arith.constant 0 : i32
    return %arg0, %c1_i32 : i32, i32
  }
  func.func @transform_1(%arg0: i32) -> (i32, i32) {
    %c0_i32 = arith.constant 0 : i32
    %c0_i32_0 = arith.constant 0 : i32
    return %arg0, %c0_i32 : i32, i32
  }
}

</mosaic_0001>

<llo_original>
// kernel: tpu_custom_call.1
$region0: #{tpu_custom_call.1}
  #allocation0 [shape = 'u32[]', space=smem, size = 0x4, offset = 0x4, fixed_abs, tag = 'smem constant byte address 0x4 - core index']
  #allocation1 [shape = 'u32[144,128]{1,0:T(1,128)}', space=vmem, size = 0x12000, scoped, tag = 'internal scratch']
  %s0 = inlined_call_operand.hbm [shape: f32[16,256], index: 0, kind: input, shape index: {}]
  %s1 = inlined_call_operand.hbm [shape: f32[16,128], index: 1, kind: output, shape index: {}]
  %s2 = sld [smem:[#allocation0]]
  $region41: #{tpu_custom_call.1} parent=0
    _
  %s4 = ssub.s32 1, %s2
  %s5 = scalar_select 0, %s4, %s2
  $region1: #{tpu_custom_call.1} parent=0
    #allocation2 [shape = 'u8[8192]{0}', space=vmem, size = 0x2000, scoped, tag = 'input window, operand 0']
    #allocation3 [shape = 's32[2]{0}', space=sflag, size = 0x8, scoped, tag = 'scoped memory for tpu_custom_call.1']
    #allocation4 [shape = 's32[2]{0}', space=sflag, size = 0x8, scoped, tag = 'scoped memory for tpu_custom_call.1']
    #allocation5 [shape = 'u8[8192]{0}', space=vmem, size = 0x2000, scoped, tag = 'output window, operand 0']
    %6 = vsyncpa [#allocation3], 0
    %s7 = scalar_lea.sflag [#allocation3], 1
    %8 = vsyncpa %s7, 0
    %9 = vsyncpa [#allocation4], 0
    %s10 = scalar_lea.sflag [#allocation4], 1
    %11 = vsyncpa %s10, 0
    loop: start=0, step=1, limit=4
    $region2: #{tpu_custom_call.1} parent=1 // loop_pre_header
      _
    $region3: #{tpu_custom_call.1} parent=1 // loop_header
      %s13 = sphi 0, %s17
      %p14 = scmp.ge.s32.totalorder %s13, 4
      %s23 = sphi 0, %s25
      %s26 = sphi 0, %s23
      %s27 = sphi 0, %s26
      %s43 = sphi 0, %s27
      %s49 = sphi 0, %s51
      %s52 = sphi 0, %s49
      %s53 = sphi 0, %s52
      %s69 = sphi 0, %s53
    $region4: #{tpu_custom_call.1} parent=1 // loop_header_branch
      %16 = sbr.rel (%p14) target = $region8
    $region5: #{tpu_custom_call.1} parent=1 // loop_body
      %s18 = ssub.s32 %s13, 1
      %s19 = ssub.s32 %s13, 2
      %s20 = sadd.s32 %s13, 1
      %s21 = ssub.s32 %s13, %s20
      %p22 = scmp.eq.s32.totalorder %s21, 0
      %s24 = sadd.s32 %s23, 1
      %s25 = scalar_select %p22, %s23, %s24
      %p28 = pneg %p22
      %p29 = scmp.eq.s32.totalorder %s13, 1
      %p30 = por %p28, %p29
      %p31 = scmp.ne.s32.totalorder %s23, %s26
      %p32 = scmp.eq.s32.totalorder %s13, 0
      %p33 = por %p31, %p32
      %p34 = scmp.ne.s32.totalorder %s23, %s26
      %p35 = scmp.eq.s32.totalorder %s18, 1
      %p36 = por %p34, %p35
      %p37 = scmp.ne.s32.totalorder %s26, %s27
      %p38 = scmp.eq.s32.totalorder %s18, 0
      %p39 = por %p37, %p38
      %p40 = scmp.ne.s32.totalorder %s26, %s27
      %p41 = scmp.eq.s32.totalorder %s19, 1
      %p42 = por %p40, %p41
      %p44 = scmp.ne.s32.totalorder %s27, %s43
      %p45 = scmp.eq.s32.totalorder %s19, 0
      %p46 = por %p44, %p45
      %s47 = ssub.s32 %s13, %s20
      %p48 = scmp.eq.s32.totalorder %s47, 0
      %s50 = sadd.s32 %s49, 1
      %s51 = scalar_select %p48, %s49, %s50
      %p54 = pneg %p48
      %p55 = scmp.eq.s32.totalorder %s13, 1
      %p56 = por %p54, %p55
      %p57 = scmp.ne.s32.totalorder %s49, %s52
      %p58 = scmp.eq.s32.totalorder %s13, 0
      %p59 = por %p57, %p58
      %p60 = scmp.ne.s32.totalorder %s49, %s52
      %p61 = scmp.eq.s32.totalorder %s18, 1
      %p62 = por %p60, %p61
      %p63 = scmp.ne.s32.totalorder %s52, %s53
      %p64 = scmp.eq.s32.totalorder %s18, 0
      %p65 = por %p63, %p64
      %p66 = scmp.ne.s32.totalorder %s52, %s53
      %p67 = scmp.eq.s32.totalorder %s19, 1
      %p68 = por %p66, %p67
      %p70 = scmp.ne.s32.totalorder %s53, %s69
      %p71 = scmp.eq.s32.totalorder %s19, 0
      %p72 = por %p70, %p71
      %p73 = scmp.le.s32.totalorder 1, %s13
      %p74 = scmp.lt.s32.totalorder %s13, 3
      %p75 = pnand %p73, %p74
      %p76 = pneg %p75
      // Predicated region
      $region9: #{tpu_custom_call.1} parent=5 // pred_check
        _
      $region10: #{tpu_custom_call.1} parent=5 // pred_check_branch
        %78 = sbr.rel (%p75) target = $region12
      $region11: #{tpu_custom_call.1} parent=5 // pred_region
        %s79 = ssub.s32 %s13, 1
      $region12: #{tpu_custom_call.1} parent=5 // pred_fallthru
        _
      %p80 = scmp.lt.s32.totalorder %s13, 2
      // Predicated region
      $region13: #{tpu_custom_call.1} parent=5 // pred_check
        %p81 = pneg %p80
      $region14: #{tpu_custom_call.1} parent=5 // pred_check_branch
        %83 = sbr.rel (%p81) target = $region16
      $region15: #{tpu_custom_call.1} parent=5 // pred_region
        // Predicated region
        $region17: #{tpu_custom_call.1} parent=15 // pred_check
          %p84 = pneg %p33
        $region18: #{tpu_custom_call.1} parent=15 // pred_check_branch
          %86 = sbr.rel (%p84) target = $region20
        $region19: #{tpu_custom_call.1} parent=15 // pred_region
          %s87 = sand.u32 %s23, 1
          %s88 = scalar_lea.sflag [#allocation3], %s87
          %s89 = sand.u32 %s23, 1
          %s90 = smul.addr %s89, 8
          %s91 = scalar_lea.vmem [#allocation2], %s90
          %s93 = ssub.s32 128, 128
          %94 = vsyncadd %s88, %s93
          %s95 = smul.addr %s13, 2
          %s96 = sadd.s32 1, %s95
          %s97 = smul.addr %s96, 128
          %s98 = scalar_lea.hbm %s0, %s97
          %s100 = sshll.u32 %s91, 4
          %s101 = int_to_ptr.vmem [resolvable:$true] %s100
          %103 = dma.hbm_to_vmem [thread:$0]  %s98, 128, %s101, %s88
        $region20: #{tpu_custom_call.1} parent=15 // pred_fallthru
          _
      $region16: #{tpu_custom_call.1} parent=5 // pred_fallthru
        _
      %p104 = scmp.le.s32.totalorder 1, %s13
      %p105 = scmp.lt.s32.totalorder %s13, 3
      %p106 = pnand %p104, %p105
      %p107 = pneg %p106
      // Predicated region
      $region21: #{tpu_custom_call.1} parent=5 // pred_check
        _
      $region22: #{tpu_custom_call.1} parent=5 // pred_check_branch
        %109 = sbr.rel (%p106) target = $region24
      $region23: #{tpu_custom_call.1} parent=5 // pred_region
        %s110 = ssub.s32 %s13, 1
        %s111 = sand.u32 %s26, 1
        %s112 = scalar_lea.sflag [#allocation3], %s111
        %s113 = sand.u32 %s26, 1
        %s114 = smul.addr %s113, 8
        %s115 = scalar_lea.vmem [#allocation2], %s114
        // Predicated region
        $region25: #{tpu_custom_call.1} parent=23 // pred_check
          %p116 = pneg %p39
        $region26: #{tpu_custom_call.1} parent=23 // pred_check_branch
          %118 = sbr.rel (%p116) target = $region28
        $region27: #{tpu_custom_call.1} parent=23 // pred_region
          %119 = dma.done %s112, 128
        $region28: #{tpu_custom_call.1} parent=23 // pred_fallthru
          _
        %s120 = sand.u32 %s26, 1
        %s121 = scalar_lea.sflag [#allocation3], %s120
        %s122 = sand.u32 %s26, 1
        %s123 = smul.addr %s122, 8
        %s124 = scalar_lea.vmem [#allocation2], %s123
        %p125 = pneg %p39
        %p126 = pneg %p36
        %p127 = pneg %p65
        %p128 = pneg %p62
        %s129 = sand.u32 %s52, 1
        %s130 = scalar_lea.sflag [#allocation4], %s129
        %s131 = sand.u32 %s52, 1
        %s132 = smul.addr %s131, 8
        %s133 = scalar_lea.vmem [#allocation5], %s132
        %v134 = vld [vmem:[%s115] sm:$0xff]
        %vm135 = vcmp.gt.f32.partialorder %v134, 20.0
        %v136 = vmin.f32 %v134, 20.0
        %v137 = vmul.f32 %v136, 1.442695
        %v138 = vpow.pop %v137
        %v139 = vadd.f32 %v138, 1.0
        %v140 = vlog2.pop %v139
        %v141 = vmul.f32 %v140, 0.6931472
        %v142 = vmul.f32 -0.5, %v138
        %v143 = vadd.f32 %v142, 1.0
        %v144 = vmul.f32 %v143, %v138
        %v145 = vand.u32 2147483647, %v138
        %vm146 = vcmp.lt.f32.partialorder %v145, 0.0004427343
        %v147 = vsel %vm146, %v144, %v141
        %v148 = vsel %vm135, %v134, %v147
        %149 = vst [vmem:[%s133] sm:$0xff] %v148
        %s150 = sand.u32 %s52, 1
        %s151 = scalar_lea.sflag [#allocation4], %s150
        %s152 = sand.u32 %s52, 1
        %s153 = smul.addr %s152, 8
        %s154 = scalar_lea.vmem [#allocation5], %s153
        // Predicated region
        $region29: #{tpu_custom_call.1} parent=23 // pred_check
          %p155 = pneg %p62
        $region30: #{tpu_custom_call.1} parent=23 // pred_check_branch
          %157 = sbr.rel (%p155) target = $region32
        $region31: #{tpu_custom_call.1} parent=23 // pred_region
          %s159 = ssub.s32 128, 128
          %160 = vsyncadd %s151, %s159
          %s161 = smul.addr %s18, 128
          %s162 = scalar_lea.hbm %s1, %s161
          %s164 = sshll.u32 %s154, 4
          %s165 = int_to_ptr.vmem [resolvable:$true] %s164
          %167 = dma.vmem_to_hbm [thread:$0]  %s165, 128, %s162, %s151
        $region32: #{tpu_custom_call.1} parent=23 // pred_fallthru
          _
      $region24: #{tpu_custom_call.1} parent=5 // pred_fallthru
        _
      %p168 = scmp.le.s32.totalorder 2, %s13
      // Predicated region
      $region33: #{tpu_custom_call.1} parent=5 // pred_check
        %p169 = pneg %p168
      $region34: #{tpu_custom_call.1} parent=5 // pred_check_branch
        %171 = sbr.rel (%p169) target = $region36
      $region35: #{tpu_custom_call.1} parent=5 // pred_region
        %s172 = ssub.s32 %s13, 2
        // Predicated region
        $region37: #{tpu_custom_call.1} parent=35 // pred_check
          %p173 = pneg %p68
        $region38: #{tpu_custom_call.1} parent=35 // pred_check_branch
          %175 = sbr.rel (%p173) target = $region40
        $region39: #{tpu_custom_call.1} parent=35 // pred_region
          %s176 = sand.u32 %s53, 1
          %s177 = scalar_lea.sflag [#allocation4], %s176
          %s178 = sand.u32 %s53, 1
          %s179 = smul.addr %s178, 8
          %s180 = scalar_lea.vmem [#allocation5], %s179
          %181 = dma.done %s177, 128
        $region40: #{tpu_custom_call.1} parent=35 // pred_fallthru
          _
      $region36: #{tpu_custom_call.1} parent=5 // pred_fallthru
        _
    $region6: #{tpu_custom_call.1} parent=1 // loop_footer
      %s17 = sadd.s32 1, %s13
    $region7: #{tpu_custom_call.1} parent=1 // loop_footer_branch
      %12 = sbr.rel target = $region3
    $region8: #{tpu_custom_call.1} parent=1 // loop_exit
      _
    %182 = vsyncpa [#allocation3], 1
    %s183 = scalar_lea.sflag [#allocation3], 1
    %184 = vsyncpa %s183, 1
    %185 = vsyncpa [#allocation4], 1
    %s186 = scalar_lea.sflag [#allocation4], 1
    %187 = vsyncpa %s186, 1

</llo_original>
